<compile_context>
chip_gen: v7x
topology: tpu7x:2x2x1
jax: 0.10.0
libtpu: 0.0.40
codegen_flags: <defaults>
</compile_context>

<pallas_src>
import functools
import math

import jax
import jax.numpy as jnp
from jax.experimental import pallas as pl
from jax.experimental.pallas import tpu as pltpu


# ----------------------------- small helpers -------------------------------

@functools.lru_cache(maxsize=None)
def _vmem_limit_bytes():
    # ~48 MiB on v7x (64 MiB physical), ~96 MiB on v5e/v6e (128 MiB physical).
    try:
        cap = int(pltpu.get_tpu_info().vmem_capacity_bytes)
    except Exception:
        cap = 64 * 1024 * 1024
    return min((cap * 3) // 4, 100 * 1024 * 1024)


def _rup(n, m=128):
    return ((n + m - 1) // m) * m


def _bf16(x):
    return x.astype(jnp.bfloat16)


def _erf(x):
    # Abramowitz & Stegun 7.1.26 rational approximation, |err| <= 1.5e-7 —
    # far below bf16 matmul noise, and uses only ops with guaranteed lowering.
    p = 0.3275911
    a1, a2, a3, a4, a5 = 0.254829592, -0.284496736, 1.421413741, -1.453152027, 1.061405429
    ax = jnp.abs(x)
    t = 1.0 / (1.0 + p * ax)
    poly = ((((a5 * t + a4) * t + a3) * t + a2) * t + a1) * t
    y = 1.0 - poly * jnp.exp(-ax * ax)
    return jnp.where(x < 0, -y, y)


def _gelu(x):
    # nn.GELU() default / HF BERT "gelu" are the exact (erf) variant.
    return 0.5 * x * (1.0 + _erf(x * 0.7071067811865476))


def _ln(x, g, b, eps, valid=None):
    # PyTorch LayerNorm (biased variance).  `valid` < last-dim enables exact
    # masked statistics for zero-padded (lane-dense) feature widths: padded
    # columns of x are exactly zero and g/b are zero-padded, so the padded
    # columns stay zero after normalization.
    n = x.shape[-1]
    v = n if valid is None else valid
    inv = 1.0 / v
    mu = jnp.sum(x, axis=-1, keepdims=True) * inv
    d = x - mu
    ss = jnp.sum(d * d, axis=-1, keepdims=True)
    if v != n:
        ss = ss - (n - v) * (mu * mu)
    return d * jax.lax.rsqrt(ss * inv + eps) * g + b


# ----------------------------- Pallas kernels ------------------------------

def _proj_kernel(x_ref, w1, b1, g1, be1, w2, b2, g2, be2, w3, b3, gn, bn, o_ref,
                 *, i1, i2):
    # Linear -> LN -> GELU -> (Dropout=id) -> Linear -> LN -> GELU -> (Dropout=id)
    # -> Linear -> shared self.norm LayerNorm.  Intermediate widths are padded to
    # multiples of 128 (lane-dense); masked LN keeps semantics exact.
    x = _bf16(x_ref[...])
    h = jnp.dot(x, w1[...], preferred_element_type=jnp.float32) + b1[...]
    h = _gelu(_ln(h, g1[...], be1[...], 1e-5, valid=i1))
    h = jnp.dot(_bf16(h), w2[...], preferred_element_type=jnp.float32) + b2[...]
    h = _gelu(_ln(h, g2[...], be2[...], 1e-5, valid=i2))
    h = jnp.dot(_bf16(h), w3[...], preferred_element_type=jnp.float32) + b3[...]
    o_ref[...] = _ln(h, gn[...], bn[...], 1e-5).astype(o_ref.dtype)


def _clf_kernel(x_ref, w1, b1, w2, b2, g2, be2, w3, b3, g3, be3, w4, b4, o_ref,
                *, nh, nh2):
    # Linear -> Linear -> LN -> GELU -> (Dropout=id) -> Linear -> LN -> GELU
    # -> (Dropout=id) -> Linear.  Hidden widths and classes padded to 128 lanes.
    x = _bf16(x_ref[...])
    h = jnp.dot(x, w1[...], preferred_element_type=jnp.float32) + b1[...]
    h = jnp.dot(_bf16(h), w2[...], preferred_element_type=jnp.float32) + b2[...]
    h = _gelu(_ln(h, g2[...], be2[...], 1e-5, valid=nh))
    h = jnp.dot(_bf16(h), w3[...], preferred_element_type=jnp.float32) + b3[...]
    h = _gelu(_ln(h, g3[...], be3[...], 1e-5, valid=nh2))
    o_ref[...] = jnp.dot(_bf16(h), w4[...], preferred_element_type=jnp.float32) + b4[...]


def _encoder_kernel(txt_ref, vis_ref, mask_ref, pos_t_ref, pos_v_ref, tok_ref,
                    eg_ref, eb_ref,
                    wqkv_ref, bqkv_ref, wo_ref, bo_ref, g1_ref, be1_ref,
                    wi_ref, bi_ref, wo2_ref, bo2_ref, g2_ref, be2_ref,
                    out_ref, h_ref, *, num_heads, seq_len):
    # Fused BertEmbeddings + every encoder layer.  Grid = (batch_blocks, layer);
    # the hidden state (Bt, L, D) stays VMEM-resident across the layer axis.
    li = pl.program_id(1)
    H = num_heads
    S = seq_len
    Bt, L, D = h_ref.shape
    dh = D // H
    R = Bt * L

    # --- embeddings at the first layer step (token order [txt block | vis block]) ---
    @pl.when(li == 0)
    def _():
        tok = tok_ref[...]                                   # (1, D)
        g, b = eg_ref[...], eb_ref[...]
        txt = txt_ref[...].astype(jnp.float32)               # (Bt, S, D)
        vis = vis_ref[...].astype(jnp.float32)
        h_ref[:, :S, :] = _ln(txt + pos_t_ref[...] + tok, g, b, 1e-12)
        h_ref[:, S:, :] = _ln(vis + pos_v_ref[...] + tok, g, b, 1e-12)

    x = h_ref[...]                                           # (Bt, L, D) f32
    x2 = x.reshape(R, D)
    xb = _bf16(x2)

    # --- fused QKV projection: one (R, D) x (D, 3D) matmul (full MXU lane fill) ---
    qkv = jnp.dot(xb, wqkv_ref[0], preferred_element_type=jnp.float32) + bqkv_ref[0]
    scale = 1.0 / math.sqrt(dh)
    q3 = (qkv[:, :D] * scale).reshape(Bt, L, D)              # fold 1/sqrt(dh) into q
    k3 = qkv[:, D:2 * D].reshape(Bt, L, D)
    v3 = qkv[:, 2 * D:].reshape(Bt, L, D)
    mask = mask_ref[...]                                     # (Bt, 1, L) additive key mask

    # --- per-head attention (batched over the Bt sequences in this block) ---
    ctx_heads = []
    for hh in range(H):
        c0 = hh * dh
        qh = _bf16(q3[:, :, c0:c0 + dh])
        kh = _bf16(k3[:, :, c0:c0 + dh])
        vh = _bf16(v3[:, :, c0:c0 + dh])
        s = jnp.einsum('bld,bmd->blm', qh, kh,
                       preferred_element_type=jnp.float32)   # (Bt, L, L)
        s = s + mask
        s = s - jnp.max(s, axis=-1, keepdims=True)
        p = jnp.exp(s)
        p = p * pl.reciprocal(jnp.sum(p, axis=-1, keepdims=True), approx=True)
        ctx_heads.append(jnp.einsum('blm,bmd->bld', _bf16(p), vh,
                                    preferred_element_type=jnp.float32))
    ctx = jnp.concatenate(ctx_heads, axis=-1).reshape(R, D)  # (R, D)

    # --- fused output projection: single K = D contraction ---
    attn = jnp.dot(_bf16(ctx), wo_ref[0], preferred_element_type=jnp.float32) + bo_ref[0]

    h1 = _ln(attn + x2, g1_ref[0], be1_ref[0], 1e-12)
    inter = _gelu(jnp.dot(_bf16(h1), wi_ref[0],
                          preferred_element_type=jnp.float32) + bi_ref[0])
    mlp = jnp.dot(_bf16(inter), wo2_ref[0],
                  preferred_element_type=jnp.float32) + bo2_ref[0]
    hn = _ln(mlp + h1, g2_ref[0], be2_ref[0], 1e-12)
    h_ref[...] = hn.reshape(Bt, L, D)

    @pl.when(li == pl.num_programs(1) - 1)
    def _():
        # visual-token hidden states = contiguous second half, emitted in bf16
        out_ref[...] = hn.reshape(Bt, L, D)[:, S:, :].astype(out_ref.dtype)


# ------------------------------ wrappers ------------------------------------

_PROJ_KEYS = ('w1', 'b1', 'g1', 'be1', 'w2', 'b2', 'g2', 'be2', 'w3', 'b3')
_CLF_KEYS = ('w1', 'b1', 'w2', 'b2', 'g2', 'be2', 'w3', 'b3', 'g3', 'be3', 'w4', 'b4')
_LAYER_KEYS = ('wqkv', 'bqkv', 'wo', 'bo', 'g1', 'be1',
               'wi', 'bi', 'wo2', 'bo2', 'g2', 'be2')


def _const_spec(w, grid_rank):
    n = w.ndim
    if grid_rank == 1:
        return pl.BlockSpec(w.shape, lambda i: (0,) * n)
    return pl.BlockSpec(w.shape, lambda i, j: (0,) * n)


def _row_tiling(n):
    # >=128-row tiles when there are enough rows; otherwise one 8-aligned tile.
    tile = 128 if n >= 128 else max(8, ((n + 7) // 8) * 8)
    n_pad = ((n + tile - 1) // tile) * tile
    return tile, n_pad


def _pick_bt(batch):
    # Largest divisor of `batch` that keeps >= 2 blocks on the parallel axis
    # (so both TensorCores are used on v7x) while amortizing weight DMA.
    if batch <= 1:
        return 1
    bt = batch // 2
    while batch % bt:
        bt -= 1
    return bt


def projection(x2d, p, norm_g, norm_b):
    n, din = x2d.shape
    dout = p['w3'].shape[1]
    tile, n_pad = _row_tiling(n)
    if n_pad != n:
        x2d = jnp.pad(x2d, ((0, n_pad - n), (0, 0)))
    weights = [p[k] for k in _PROJ_KEYS] + [norm_g, norm_b]
    out = pl.pallas_call(
        functools.partial(_proj_kernel, i1=p['i1'], i2=p['i2']),
        out_shape=jax.ShapeDtypeStruct((n_pad, dout), jnp.bfloat16),
        grid=(n_pad // tile,),
        in_specs=[pl.BlockSpec((tile, din), lambda i: (i, 0))]
                 + [_const_spec(w, 1) for w in weights],
        out_specs=pl.BlockSpec((tile, dout), lambda i: (i, 0)),
        compiler_params=pltpu.CompilerParams(
            dimension_semantics=("parallel",), vmem_limit_bytes=_vmem_limit_bytes()),
    )(x2d, *weights)
    return out if n_pad == n else out[:n]


def classifier(x2d, p, *, num_classes):
    n, din = x2d.shape
    ncp = p['w4'].shape[1]                     # classes padded to a multiple of 128
    tile, n_pad = _row_tiling(n)
    if n_pad != n:
        x2d = jnp.pad(x2d, ((0, n_pad - n), (0, 0)))
    weights = [p[k] for k in _CLF_KEYS]
    out = pl.pallas_call(
        functools.partial(_clf_kernel, nh=p['nh'], nh2=p['nh2']),
        out_shape=jax.ShapeDtypeStruct((n_pad, ncp), jnp.float32),
        grid=(n_pad // tile,),
        in_specs=[pl.BlockSpec((tile, din), lambda i: (i, 0))]
                 + [_const_spec(w, 1) for w in weights],
        out_specs=pl.BlockSpec((tile, ncp), lambda i: (i, 0)),
        compiler_params=pltpu.CompilerParams(
            dimension_semantics=("parallel",), vmem_limit_bytes=_vmem_limit_bytes()),
    )(x2d, *weights)
    return out[:n, :num_classes]


def bert_encoder(p_txt, p_vis, mask_add, pos_t, pos_v, tok, eg, eb, enc, *, num_heads):
    B, S, D = p_txt.shape
    L = 2 * S
    NL = enc['wqkv'].shape[0]
    Bt = _pick_bt(B)
    nb = B // Bt

    def batch_spec(w):
        n = w.ndim
        return pl.BlockSpec((Bt,) + w.shape[1:], lambda b, l: (b,) + (0,) * (n - 1))

    def layer_spec(w):
        n = w.ndim
        return pl.BlockSpec((1,) + w.shape[1:], lambda b, l: (l,) + (0,) * (n - 1))

    layer_ws = [enc[k] for k in _LAYER_KEYS]
    # Batch-indexed inputs are fetched once per batch block; stacked per-layer
    # weights are streamed (double-buffered) across the "arbitrary" layer axis.
    in_specs = ([batch_spec(p_txt), batch_spec(p_vis), batch_spec(mask_add)]
                + [_const_spec(w, 2) for w in (pos_t, pos_v, tok, eg, eb)]
                + [layer_spec(w) for w in layer_ws])

    return pl.pallas_call(
        functools.partial(_encoder_kernel, num_heads=num_heads, seq_len=S),
        out_shape=jax.ShapeDtypeStruct((B, S, D), jnp.bfloat16),
        grid=(nb, NL),
        in_specs=in_specs,
        out_specs=pl.BlockSpec((Bt, S, D), lambda b, l: (b, 0, 0)),
        scratch_shapes=[pltpu.VMEM((Bt, L, D), jnp.float32)],
        compiler_params=pltpu.CompilerParams(
            dimension_semantics=("parallel", "arbitrary"),
            vmem_limit_bytes=_vmem_limit_bytes()),
    )(p_txt, p_vis, mask_add, pos_t, pos_v, tok, eg, eb, *layer_ws)


def book_bert_multimodal2(params, textual, visual, attention_mask, *,
                          num_heads, num_classes):
    B, S, Ft = textual.shape
    Fv = visual.shape[-1]
    D = params['norm_g'].shape[-1]
    L = 2 * S

    # textual_projection / visual_projection (+ shared self.norm), row-tiled.
    p_txt = projection(textual.reshape(B * S, Ft), params['txt_proj'],
                       params['norm_g'], params['norm_b']).reshape(B, S, D)
    p_vis = projection(visual.reshape(B * S, Fv), params['vis_proj'],
                       params['norm_g'], params['norm_b']).reshape(B, S, D)

    # Permuted token order [txt block | vis block] (attention is permutation-
    # equivariant): interleaved position ids become pos[0::2] / pos[1::2], and
    # the interleaved key mask repeat(mask, 2) becomes concat([mask, mask]).
    pos = params['pos_emb'][:L]
    pos_t = pos[0::2]
    pos_v = pos[1::2]
    mask = attention_mask.astype(jnp.float32)
    mask_add = ((1.0 - jnp.concatenate([mask, mask], axis=1)) * -1e9).reshape(B, 1, L)

    vis_hidden = bert_encoder(p_txt, p_vis, mask_add, pos_t, pos_v,
                              params['tok_emb'], params['emb_ln_g'],
                              params['emb_ln_b'], params['enc'],
                              num_heads=num_heads)

    logits = classifier(vis_hidden.reshape(B * S, D), params['clf'],
                        num_classes=num_classes)
    return logits.reshape(B, S, num_classes)


# --------------------------- parameter init ---------------------------------

def init_params(key, *, Ft, Fv, D, num_layers, num_heads, hidden_dim,
                num_classes, max_len):
    keys = iter(jax.random.split(key, 256))

    def rnd(shape):
        return jax.random.normal(next(keys), shape, jnp.float32) * 0.02

    def lnp(dim, pad_to=None):
        p = pad_to if pad_to is not None else dim
        g = jnp.pad(jnp.ones((1, dim), jnp.float32), ((0, 0), (0, p - dim)))
        b = jnp.zeros((1, p), jnp.float32)
        return g, b

    def proj_params(fin):
        i1 = (fin + D) * 2
        i2 = i1 // 2
        i1p, i2p = _rup(i1), _rup(i2)
        w1 = jnp.pad(rnd((fin, i1)), ((0, 0), (0, i1p - i1))).astype(jnp.bfloat16)
        b1 = jnp.zeros((1, i1p), jnp.float32)
        g1, be1 = lnp(i1, i1p)
        w2 = jnp.pad(rnd((i1, i2)), ((0, i1p - i1), (0, i2p - i2))).astype(jnp.bfloat16)
        b2 = jnp.zeros((1, i2p), jnp.float32)
        g2, be2 = lnp(i2, i2p)
        w3 = jnp.pad(rnd((i2, D)), ((0, i2p - i2), (0, 0))).astype(jnp.bfloat16)
        b3 = jnp.zeros((1, D), jnp.float32)
        return dict(w1=w1, b1=b1, g1=g1, be1=be1, w2=w2, b2=b2, g2=g2, be2=be2,
                    w3=w3, b3=b3, i1=i1, i2=i2)

    # ----- encoder layers: fused QKV (D, 3D) and WO (D, D), stacked over layers -----
    per_layer = []
    for _ in range(num_layers):
        wq, wk, wv, wo = rnd((D, D)), rnd((D, D)), rnd((D, D)), rnd((D, D))
        wqkv = jnp.concatenate([wq, wk, wv], axis=1).astype(jnp.bfloat16)
        g1, be1 = lnp(D)
        g2, be2 = lnp(D)
        per_layer.append(dict(
            wqkv=wqkv, bqkv=jnp.zeros((1, 3 * D), jnp.float32),
            wo=wo.astype(jnp.bfloat16), bo=jnp.zeros((1, D), jnp.float32),
            g1=g1, be1=be1,
            wi=rnd((D, 4 * D)).astype(jnp.bfloat16), bi=jnp.zeros((1, 4 * D), jnp.float32),
            wo2=rnd((4 * D, D)).astype(jnp.bfloat16), bo2=jnp.zeros((1, D), jnp.float32),
            g2=g2, be2=be2))
    enc = {k: jnp.stack([lp[k] for lp in per_layer]) for k in _LAYER_KEYS}

    # ----- classifier (hidden widths and classes padded to multiples of 128) -----
    mid = (D + hidden_dim) // 2
    nh, nh2 = hidden_dim, hidden_dim // 2
    midp, nhp, nh2p, ncp = _rup(mid), _rup(nh), _rup(nh2), _rup(num_classes)
    cw1 = jnp.pad(rnd((D, mid)), ((0, 0), (0, midp - mid))).astype(jnp.bfloat16)
    cb1 = jnp.zeros((1, midp), jnp.float32)
    cw2 = jnp.pad(rnd((mid, nh)), ((0, midp - mid), (0, nhp - nh))).astype(jnp.bfloat16)
    cb2 = jnp.zeros((1, nhp), jnp.float32)
    cg2, cbe2 = lnp(nh, nhp)
    cw3 = jnp.pad(rnd((nh, nh2)), ((0, nhp - nh), (0, nh2p - nh2))).astype(jnp.bfloat16)
    cb3 = jnp.zeros((1, nh2p), jnp.float32)
    cg3, cbe3 = lnp(nh2, nh2p)
    cw4 = jnp.pad(rnd((nh2, num_classes)),
                  ((0, nh2p - nh2), (0, ncp - num_classes))).astype(jnp.bfloat16)
    cb4 = jnp.zeros((1, ncp), jnp.float32)
    clf = dict(w1=cw1, b1=cb1, w2=cw2, b2=cb2, g2=cg2, be2=cbe2,
               w3=cw3, b3=cb3, g3=cg3, be3=cbe3, w4=cw4, b4=cb4, nh=nh, nh2=nh2)

    norm_g, norm_b = lnp(D)
    emb_ln_g, emb_ln_b = lnp(D)
    pos_emb = jax.random.normal(next(keys), (max_len, D), jnp.float32) * 0.02
    tok_emb = jax.random.normal(next(keys), (1, D), jnp.float32) * 0.02

    return dict(txt_proj=proj_params(Ft), vis_proj=proj_params(Fv), enc=enc,
                clf=clf, norm_g=norm_g, norm_b=norm_b,
                emb_ln_g=emb_ln_g, emb_ln_b=emb_ln_b,
                pos_emb=pos_emb, tok_emb=tok_emb)


# --------------------------------- main --------------------------------------

if __name__ == "__main__":
    # Small config consistent with the module's constructor.
    B, S = 2, 8
    TXT_DIM, VIS_DIM = 32, 48
    BERT_DIM = 64
    NUM_LAYERS = 2
    NUM_HEADS = 4
    HIDDEN = 32
    NUM_CLASSES = 4
    MAX_LEN = 64          # > 2*S: exercises position-embedding slicing

    key = jax.random.PRNGKey(0)
    k_p, k_t, k_v = jax.random.split(key, 3)

    params = init_params(k_p, Ft=TXT_DIM, Fv=VIS_DIM, D=BERT_DIM,
                         num_layers=NUM_LAYERS, num_heads=NUM_HEADS,
                         hidden_dim=HIDDEN, num_classes=NUM_CLASSES,
                         max_len=MAX_LEN)

    textual = jax.random.normal(k_t, (B, S, TXT_DIM), jnp.float32)
    visual = jax.random.normal(k_v, (B, S, VIS_DIM), jnp.float32)
    attention_mask = jnp.ones((B, S), jnp.float32).at[1, -1].set(0.0)

    logits = book_bert_multimodal2(params, textual, visual, attention_mask,
                                   num_heads=NUM_HEADS, num_classes=NUM_CLASSES)
    jax.block_until_ready(logits)
    assert logits.shape == (B, S, NUM_CLASSES)
    assert bool(jnp.all(jnp.isfinite(logits)))
    print("KERNEL_OK")
</pallas_src>

<mosaic_0001>
module attributes {stable_mosaic.version = 11 : i64} {
  func.func @_proj_kernel(%arg0: i32, %arg1: memref<16x32xf32, #tpu.memory_space<vmem>>, %arg2: memref<32x256xbf16, #tpu.memory_space<vmem>>, %arg3: memref<1x256xf32, #tpu.memory_space<vmem>>, %arg4: memref<1x256xf32, #tpu.memory_space<vmem>>, %arg5: memref<1x256xf32, #tpu.memory_space<vmem>>, %arg6: memref<256x128xbf16, #tpu.memory_space<vmem>>, %arg7: memref<1x128xf32, #tpu.memory_space<vmem>>, %arg8: memref<1x128xf32, #tpu.memory_space<vmem>>, %arg9: memref<1x128xf32, #tpu.memory_space<vmem>>, %arg10: memref<128x64xbf16, #tpu.memory_space<vmem>>, %arg11: memref<1x64xf32, #tpu.memory_space<vmem>>, %arg12: memref<1x64xf32, #tpu.memory_space<vmem>>, %arg13: memref<1x64xf32, #tpu.memory_space<vmem>>, %arg14: memref<16x64xbf16, #tpu.memory_space<vmem>>) attributes {dimension_semantics = [#tpu.dimension_semantics<parallel>], iteration_bounds = array<i64: 1>, scalar_prefetch = 0 : i64, scratch_operands = 0 : i64, tpu.core_type = #tpu.core_type<tc>, window_params = [{transform_indices = @transform_0, window_bounds = array<i64: 16, 32>}, {pipeline_mode = #tpu.pipeline_mode<synchronous>, transform_indices = @transform_1, window_bounds = array<i64: 32, 256>}, {pipeline_mode = #tpu.pipeline_mode<synchronous>, transform_indices = @transform_2, window_bounds = array<i64: 1, 256>}, {pipeline_mode = #tpu.pipeline_mode<synchronous>, transform_indices = @transform_3, window_bounds = array<i64: 1, 256>}, {pipeline_mode = #tpu.pipeline_mode<synchronous>, transform_indices = @transform_4, window_bounds = array<i64: 1, 256>}, {pipeline_mode = #tpu.pipeline_mode<synchronous>, transform_indices = @transform_5, window_bounds = array<i64: 256, 128>}, {pipeline_mode = #tpu.pipeline_mode<synchronous>, transform_indices = @transform_6, window_bounds = array<i64: 1, 128>}, {pipeline_mode = #tpu.pipeline_mode<synchronous>, transform_indices = @transform_7, window_bounds = array<i64: 1, 128>}, {pipeline_mode = #tpu.pipeline_mode<synchronous>, transform_indices = @transform_8, window_bounds = array<i64: 1, 128>}, {pipeline_mode = #tpu.pipeline_mode<synchronous>, transform_indices = @transform_9, window_bounds = array<i64: 128, 64>}, {pipeline_mode = #tpu.pipeline_mode<synchronous>, transform_indices = @transform_10, window_bounds = array<i64: 1, 64>}, {pipeline_mode = #tpu.pipeline_mode<synchronous>, transform_indices = @transform_11, window_bounds = array<i64: 1, 64>}, {pipeline_mode = #tpu.pipeline_mode<synchronous>, transform_indices = @transform_12, window_bounds = array<i64: 1, 64>}, {transform_indices = @transform_13, window_bounds = array<i64: 16, 64>}]} {
    %c0 = arith.constant 0 : index
    %c0_0 = arith.constant 0 : index
    %0 = vector.load %arg1[%c0, %c0_0] : memref<16x32xf32, #tpu.memory_space<vmem>>, vector<16x32xf32>
    %1 = arith.truncf %0 : vector<16x32xf32> to vector<16x32xbf16>
    %c0_1 = arith.constant 0 : index
    %c0_2 = arith.constant 0 : index
    %2 = vector.load %arg2[%c0_1, %c0_2] : memref<32x256xbf16, #tpu.memory_space<vmem>>, vector<32x256xbf16>
    %cst = arith.constant dense<0.000000e+00> : vector<16x256xf32>
    %3 = tpu.matmul %1, %2, %cst {dimension_numbers = #tpu.dot_dimension_numbers<[1], [0], [0], [1], [0, 0, 1, 1], [], []>} : vector<16x32xbf16>, vector<32x256xbf16>, vector<16x256xf32> -> vector<16x256xf32>
    %c0_3 = arith.constant 0 : index
    %c0_4 = arith.constant 0 : index
    %4 = vector.load %arg3[%c0_3, %c0_4] : memref<1x256xf32, #tpu.memory_space<vmem>>, vector<1x256xf32>
    %5 = vector.broadcast %4 : vector<1x256xf32> to vector<16x256xf32>
    %6 = arith.addf %3, %5 : vector<16x256xf32>
    %c0_5 = arith.constant 0 : index
    %c0_6 = arith.constant 0 : index
    %7 = vector.load %arg4[%c0_5, %c0_6] : memref<1x256xf32, #tpu.memory_space<vmem>>, vector<1x256xf32>
    %c0_7 = arith.constant 0 : index
    %c0_8 = arith.constant 0 : index
    %8 = vector.load %arg5[%c0_7, %c0_8] : memref<1x256xf32, #tpu.memory_space<vmem>>, vector<1x256xf32>
    %cst_9 = arith.constant dense<0.000000e+00> : vector<16xf32>
    %9 = vector.multi_reduction <add>, %6, %cst_9 [1] : vector<16x256xf32> to vector<16xf32>
    %10 = vector.shape_cast %9 : vector<16xf32> to vector<16x1xf32>
    %cst_10 = arith.constant 0.00520833349 : f32
    %11 = vector.broadcast %cst_10 : f32 to vector<16x1xf32>
    %12 = arith.mulf %10, %11 : vector<16x1xf32>
    %13 = vector.broadcast %12 : vector<16x1xf32> to vector<16x256xf32>
    %14 = arith.subf %6, %13 : vector<16x256xf32>
    %15 = arith.mulf %14, %14 : vector<16x256xf32>
    %cst_11 = arith.constant dense<0.000000e+00> : vector<16xf32>
    %16 = vector.multi_reduction <add>, %15, %cst_11 [1] : vector<16x256xf32> to vector<16xf32>
    %17 = vector.shape_cast %16 : vector<16xf32> to vector<16x1xf32>
    %18 = arith.mulf %12, %12 : vector<16x1xf32>
    %cst_12 = arith.constant 6.400000e+01 : f32
    %19 = vector.broadcast %cst_12 : f32 to vector<16x1xf32>
    %20 = arith.mulf %19, %18 : vector<16x1xf32>
    %21 = arith.subf %17, %20 : vector<16x1xf32>
    %cst_13 = arith.constant 0.00520833349 : f32
    %22 = vector.broadcast %cst_13 : f32 to vector<16x1xf32>
    %23 = arith.mulf %21, %22 : vector<16x1xf32>
    %cst_14 = arith.constant 9.99999974E-6 : f32
    %24 = vector.broadcast %cst_14 : f32 to vector<16x1xf32>
    %25 = arith.addf %23, %24 : vector<16x1xf32>
    %26 = math.rsqrt %25 : vector<16x1xf32>
    %27 = vector.broadcast %26 : vector<16x1xf32> to vector<16x256xf32>
    %28 = arith.mulf %14, %27 : vector<16x256xf32>
    %29 = vector.broadcast %7 : vector<1x256xf32> to vector<16x256xf32>
    %30 = arith.mulf %28, %29 : vector<16x256xf32>
    %31 = vector.broadcast %8 : vector<1x256xf32> to vector<16x256xf32>
    %32 = arith.addf %30, %31 : vector<16x256xf32>
    %cst_15 = arith.constant 5.000000e-01 : f32
    %33 = vector.broadcast %cst_15 : f32 to vector<16x256xf32>
    %34 = arith.mulf %33, %32 : vector<16x256xf32>
    %cst_16 = arith.constant 0.707106769 : f32
    %35 = vector.broadcast %cst_16 : f32 to vector<16x256xf32>
    %36 = arith.mulf %32, %35 : vector<16x256xf32>
    %37 = math.absf %36 : vector<16x256xf32>
    %cst_17 = arith.constant 0.327591091 : f32
    %38 = vector.broadcast %cst_17 : f32 to vector<16x256xf32>
    %39 = arith.mulf %38, %37 : vector<16x256xf32>
    %cst_18 = arith.constant 1.000000e+00 : f32
    %40 = vector.broadcast %cst_18 : f32 to vector<16x256xf32>
    %41 = arith.addf %40, %39 : vector<16x256xf32>
    %cst_19 = arith.constant 1.000000e+00 : f32
    %42 = vector.broadcast %cst_19 : f32 to vector<16x256xf32>
    %43 = arith.divf %42, %41 : vector<16x256xf32>
    %cst_20 = arith.constant 1.06140542 : f32
    %44 = vector.broadcast %cst_20 : f32 to vector<16x256xf32>
    %45 = arith.mulf %44, %43 : vector<16x256xf32>
    %cst_21 = arith.constant -1.45315206 : f32
    %46 = vector.broadcast %cst_21 : f32 to vector<16x256xf32>
    %47 = arith.addf %45, %46 : vector<16x256xf32>
    %48 = arith.mulf %47, %43 : vector<16x256xf32>
    %cst_22 = arith.constant 1.42141378 : f32
    %49 = vector.broadcast %cst_22 : f32 to vector<16x256xf32>
    %50 = arith.addf %48, %49 : vector<16x256xf32>
    %51 = arith.mulf %50, %43 : vector<16x256xf32>
    %cst_23 = arith.constant -0.284496725 : f32
    %52 = vector.broadcast %cst_23 : f32 to vector<16x256xf32>
    %53 = arith.addf %51, %52 : vector<16x256xf32>
    %54 = arith.mulf %53, %43 : vector<16x256xf32>
    %cst_24 = arith.constant 0.254829586 : f32
    %55 = vector.broadcast %cst_24 : f32 to vector<16x256xf32>
    %56 = arith.addf %54, %55 : vector<16x256xf32>
    %57 = arith.mulf %56, %43 : vector<16x256xf32>
    %cst_25 = arith.constant 0.000000e+00 : f32
    %58 = vector.broadcast %cst_25 : f32 to vector<16x256xf32>
    %59 = arith.subf %58, %37 : vector<16x256xf32>
    %60 = arith.mulf %59, %37 : vector<16x256xf32>
    %61 = math.exp %60 : vector<16x256xf32>
    %62 = arith.mulf %57, %61 : vector<16x256xf32>
    %cst_26 = arith.constant 1.000000e+00 : f32
    %63 = vector.broadcast %cst_26 : f32 to vector<16x256xf32>
    %64 = arith.subf %63, %62 : vector<16x256xf32>
    %cst_27 = arith.constant 0.000000e+00 : f32
    %65 = vector.broadcast %cst_27 : f32 to vector<16x256xf32>
    %66 = arith.cmpf olt, %36, %65 : vector<16x256xf32>
    %cst_28 = arith.constant 0.000000e+00 : f32
    %67 = vector.broadcast %cst_28 : f32 to vector<16x256xf32>
    %68 = arith.subf %67, %64 : vector<16x256xf32>
    %69 = arith.select %66, %68, %64 : vector<16x256xi1>, vector<16x256xf32>
    %cst_29 = arith.constant 1.000000e+00 : f32
    %70 = vector.broadcast %cst_29 : f32 to vector<16x256xf32>
    %71 = arith.addf %70, %69 : vector<16x256xf32>
    %72 = arith.mulf %34, %71 : vector<16x256xf32>
    %73 = arith.truncf %72 : vector<16x256xf32> to vector<16x256xbf16>
    %c0_30 = arith.constant 0 : index
    %c0_31 = arith.constant 0 : index
    %74 = vector.load %arg6[%c0_30, %c0_31] : memref<256x128xbf16, #tpu.memory_space<vmem>>, vector<256x128xbf16>
    %cst_32 = arith.constant dense<0.000000e+00> : vector<16x128xf32>
    %75 = tpu.matmul %73, %74, %cst_32 {dimension_numbers = #tpu.dot_dimension_numbers<[1], [0], [0], [1], [0, 0, 1, 1], [], []>} : vector<16x256xbf16>, vector<256x128xbf16>, vector<16x128xf32> -> vector<16x128xf32>
    %c0_33 = arith.constant 0 : index
    %c0_34 = arith.constant 0 : index
    %76 = vector.load %arg7[%c0_33, %c0_34] : memref<1x128xf32, #tpu.memory_space<vmem>>, vector<1x128xf32>
    %77 = vector.broadcast %76 : vector<1x128xf32> to vector<16x128xf32>
    %78 = arith.addf %75, %77 : vector<16x128xf32>
    %c0_35 = arith.constant 0 : index
    %c0_36 = arith.constant 0 : index
    %79 = vector.load %arg8[%c0_35, %c0_36] : memref<1x128xf32, #tpu.memory_space<vmem>>, vector<1x128xf32>
    %c0_37 = arith.constant 0 : index
    %c0_38 = arith.constant 0 : index
    %80 = vector.load %arg9[%c0_37, %c0_38] : memref<1x128xf32, #tpu.memory_space<vmem>>, vector<1x128xf32>
    %cst_39 = arith.constant dense<0.000000e+00> : vector<16xf32>
    %81 = vector.multi_reduction <add>, %78, %cst_39 [1] : vector<16x128xf32> to vector<16xf32>
    %82 = vector.shape_cast %81 : vector<16xf32> to vector<16x1xf32>
    %cst_40 = arith.constant 0.010416667 : f32
    %83 = vector.broadcast %cst_40 : f32 to vector<16x1xf32>
    %84 = arith.mulf %82, %83 : vector<16x1xf32>
    %85 = vector.broadcast %84 : vector<16x1xf32> to vector<16x128xf32>
    %86 = arith.subf %78, %85 : vector<16x128xf32>
    %87 = arith.mulf %86, %86 : vector<16x128xf32>
    %cst_41 = arith.constant dense<0.000000e+00> : vector<16xf32>
    %88 = vector.multi_reduction <add>, %87, %cst_41 [1] : vector<16x128xf32> to vector<16xf32>
    %89 = vector.shape_cast %88 : vector<16xf32> to vector<16x1xf32>
    %90 = arith.mulf %84, %84 : vector<16x1xf32>
    %cst_42 = arith.constant 3.200000e+01 : f32
    %91 = vector.broadcast %cst_42 : f32 to vector<16x1xf32>
    %92 = arith.mulf %91, %90 : vector<16x1xf32>
    %93 = arith.subf %89, %92 : vector<16x1xf32>
    %cst_43 = arith.constant 0.010416667 : f32
    %94 = vector.broadcast %cst_43 : f32 to vector<16x1xf32>
    %95 = arith.mulf %93, %94 : vector<16x1xf32>
    %cst_44 = arith.constant 9.99999974E-6 : f32
    %96 = vector.broadcast %cst_44 : f32 to vector<16x1xf32>
    %97 = arith.addf %95, %96 : vector<16x1xf32>
    %98 = math.rsqrt %97 : vector<16x1xf32>
    %99 = vector.broadcast %98 : vector<16x1xf32> to vector<16x128xf32>
    %100 = arith.mulf %86, %99 : vector<16x128xf32>
    %101 = vector.broadcast %79 : vector<1x128xf32> to vector<16x128xf32>
    %102 = arith.mulf %100, %101 : vector<16x128xf32>
    %103 = vector.broadcast %80 : vector<1x128xf32> to vector<16x128xf32>
    %104 = arith.addf %102, %103 : vector<16x128xf32>
    %cst_45 = arith.constant 5.000000e-01 : f32
    %105 = vector.broadcast %cst_45 : f32 to vector<16x128xf32>
    %106 = arith.mulf %105, %104 : vector<16x128xf32>
    %cst_46 = arith.constant 0.707106769 : f32
    %107 = vector.broadcast %cst_46 : f32 to vector<16x128xf32>
    %108 = arith.mulf %104, %107 : vector<16x128xf32>
    %109 = math.absf %108 : vector<16x128xf32>
    %cst_47 = arith.constant 0.327591091 : f32
    %110 = vector.broadcast %cst_47 : f32 to vector<16x128xf32>
    %111 = arith.mulf %110, %109 : vector<16x128xf32>
    %cst_48 = arith.constant 1.000000e+00 : f32
    %112 = vector.broadcast %cst_48 : f32 to vector<16x128xf32>
    %113 = arith.addf %112, %111 : vector<16x128xf32>
    %cst_49 = arith.constant 1.000000e+00 : f32
    %114 = vector.broadcast %cst_49 : f32 to vector<16x128xf32>
    %115 = arith.divf %114, %113 : vector<16x128xf32>
    %cst_50 = arith.constant 1.06140542 : f32
    %116 = vector.broadcast %cst_50 : f32 to vector<16x128xf32>
    %117 = arith.mulf %116, %115 : vector<16x128xf32>
    %cst_51 = arith.constant -1.45315206 : f32
    %118 = vector.broadcast %cst_51 : f32 to vector<16x128xf32>
    %119 = arith.addf %117, %118 : vector<16x128xf32>
    %120 = arith.mulf %119, %115 : vector<16x128xf32>
    %cst_52 = arith.constant 1.42141378 : f32
    %121 = vector.broadcast %cst_52 : f32 to vector<16x128xf32>
    %122 = arith.addf %120, %121 : vector<16x128xf32>
    %123 = arith.mulf %122, %115 : vector<16x128xf32>
    %cst_53 = arith.constant -0.284496725 : f32
    %124 = vector.broadcast %cst_53 : f32 to vector<16x128xf32>
    %125 = arith.addf %123, %124 : vector<16x128xf32>
    %126 = arith.mulf %125, %115 : vector<16x128xf32>
    %cst_54 = arith.constant 0.254829586 : f32
    %127 = vector.broadcast %cst_54 : f32 to vector<16x128xf32>
    %128 = arith.addf %126, %127 : vector<16x128xf32>
    %129 = arith.mulf %128, %115 : vector<16x128xf32>
    %cst_55 = arith.constant 0.000000e+00 : f32
    %130 = vector.broadcast %cst_55 : f32 to vector<16x128xf32>
    %131 = arith.subf %130, %109 : vector<16x128xf32>
    %132 = arith.mulf %131, %109 : vector<16x128xf32>
    %133 = math.exp %132 : vector<16x128xf32>
    %134 = arith.mulf %129, %133 : vector<16x128xf32>
    %cst_56 = arith.constant 1.000000e+00 : f32
    %135 = vector.broadcast %cst_56 : f32 to vector<16x128xf32>
    %136 = arith.subf %135, %134 : vector<16x128xf32>
    %cst_57 = arith.constant 0.000000e+00 : f32
    %137 = vector.broadcast %cst_57 : f32 to vector<16x128xf32>
    %138 = arith.cmpf olt, %108, %137 : vector<16x128xf32>
    %cst_58 = arith.constant 0.000000e+00 : f32
    %139 = vector.broadcast %cst_58 : f32 to vector<16x128xf32>
    %140 = arith.subf %139, %136 : vector<16x128xf32>
    %141 = arith.select %138, %140, %136 : vector<16x128xi1>, vector<16x128xf32>
    %cst_59 = arith.constant 1.000000e+00 : f32
    %142 = vector.broadcast %cst_59 : f32 to vector<16x128xf32>
    %143 = arith.addf %142, %141 : vector<16x128xf32>
    %144 = arith.mulf %106, %143 : vector<16x128xf32>
    %145 = arith.truncf %144 : vector<16x128xf32> to vector<16x128xbf16>
    %c0_60 = arith.constant 0 : index
    %c0_61 = arith.constant 0 : index
    %146 = vector.load %arg10[%c0_60, %c0_61] : memref<128x64xbf16, #tpu.memory_space<vmem>>, vector<128x64xbf16>
    %cst_62 = arith.constant dense<0.000000e+00> : vector<16x64xf32>
    %147 = tpu.matmul %145, %146, %cst_62 {dimension_numbers = #tpu.dot_dimension_numbers<[1], [0], [0], [1], [0, 0, 1, 1], [], []>} : vector<16x128xbf16>, vector<128x64xbf16>, vector<16x64xf32> -> vector<16x64xf32>
    %c0_63 = arith.constant 0 : index
    %c0_64 = arith.constant 0 : index
    %148 = vector.load %arg11[%c0_63, %c0_64] : memref<1x64xf32, #tpu.memory_space<vmem>>, vector<1x64xf32>
    %149 = vector.broadcast %148 : vector<1x64xf32> to vector<16x64xf32>
    %150 = arith.addf %147, %149 : vector<16x64xf32>
    %c0_65 = arith.constant 0 : index
    %c0_66 = arith.constant 0 : index
    %151 = vector.load %arg12[%c0_65, %c0_66] : memref<1x64xf32, #tpu.memory_space<vmem>>, vector<1x64xf32>
    %c0_67 = arith.constant 0 : index
    %c0_68 = arith.constant 0 : index
    %152 = vector.load %arg13[%c0_67, %c0_68] : memref<1x64xf32, #tpu.memory_space<vmem>>, vector<1x64xf32>
    %cst_69 = arith.constant dense<0.000000e+00> : vector<16xf32>
    %153 = vector.multi_reduction <add>, %150, %cst_69 [1] : vector<16x64xf32> to vector<16xf32>
    %154 = vector.shape_cast %153 : vector<16xf32> to vector<16x1xf32>
    %cst_70 = arith.constant 1.562500e-02 : f32
    %155 = vector.broadcast %cst_70 : f32 to vector<16x1xf32>
    %156 = arith.mulf %154, %155 : vector<16x1xf32>
    %157 = vector.broadcast %156 : vector<16x1xf32> to vector<16x64xf32>
    %158 = arith.subf %150, %157 : vector<16x64xf32>
    %159 = arith.mulf %158, %158 : vector<16x64xf32>
    %cst_71 = arith.constant dense<0.000000e+00> : vector<16xf32>
    %160 = vector.multi_reduction <add>, %159, %cst_71 [1] : vector<16x64xf32> to vector<16xf32>
    %161 = vector.shape_cast %160 : vector<16xf32> to vector<16x1xf32>
    %cst_72 = arith.constant 1.562500e-02 : f32
    %162 = vector.broadcast %cst_72 : f32 to vector<16x1xf32>
    %163 = arith.mulf %161, %162 : vector<16x1xf32>
    %cst_73 = arith.constant 9.99999974E-6 : f32
    %164 = vector.broadcast %cst_73 : f32 to vector<16x1xf32>
    %165 = arith.addf %163, %164 : vector<16x1xf32>
    %166 = math.rsqrt %165 : vector<16x1xf32>
    %167 = vector.broadcast %166 : vector<16x1xf32> to vector<16x64xf32>
    %168 = arith.mulf %158, %167 : vector<16x64xf32>
    %169 = vector.broadcast %151 : vector<1x64xf32> to vector<16x64xf32>
    %170 = arith.mulf %168, %169 : vector<16x64xf32>
    %171 = vector.broadcast %152 : vector<1x64xf32> to vector<16x64xf32>
    %172 = arith.addf %170, %171 : vector<16x64xf32>
    %173 = arith.truncf %172 : vector<16x64xf32> to vector<16x64xbf16>
    %c0_74 = arith.constant 0 : index
    %c0_75 = arith.constant 0 : index
    %174 = vector.load %arg14[%c0_74, %c0_75] : memref<16x64xbf16, #tpu.memory_space<vmem>>, vector<16x64xbf16>
    tpu.vector_store %arg14[%c0_74, %c0_75], %173 {strides = array<i32>} : memref<16x64xbf16, #tpu.memory_space<vmem>>, vector<16x64xbf16>,
    return
  }
  func.func @transform_0(%arg0: i32) -> (i32, i32) {
    %c0_i32 = arith.constant 0 : i32
    %c0_i32_0 = arith.constant 0 : i32
    return %arg0, %c0_i32 : i32, i32
  }
  func.func @transform_1(%arg0: i32) -> (i32, i32) {
    %c0_i32 = arith.constant 0 : i32
    %c0_i32_0 = arith.constant 0 : i32
    %c0_i32_1 = arith.constant 0 : i32
    return %c0_i32, %c0_i32_0 : i32, i32
  }
  func.func @transform_2(%arg0: i32) -> (i32, i32) {
    %c0_i32 = arith.constant 0 : i32
    %c0_i32_0 = arith.constant 0 : i32
    %c0_i32_1 = arith.constant 0 : i32
    return %c0_i32, %c0_i32_0 : i32, i32
  }
  func.func @transform_3(%arg0: i32) -> (i32, i32) {
    %c0_i32 = arith.constant 0 : i32
    %c0_i32_0 = arith.constant 0 : i32
    %c0_i32_1 = arith.constant 0 : i32
    return %c0_i32, %c0_i32_0 : i32, i32
  }
  func.func @transform_4(%arg0: i32) -> (i32, i32) {
    %c0_i32 = arith.constant 0 : i32
    %c0_i32_0 = arith.constant 0 : i32
    %c0_i32_1 = arith.constant 0 : i32
    return %c0_i32, %c0_i32_0 : i32, i32
  }
  func.func @transform_5(%arg0: i32) -> (i32, i32) {
    %c0_i32 = arith.constant 0 : i32
    %c0_i32_0 = arith.constant 0 : i32
    %c0_i32_1 = arith.constant 0 : i32
    return %c0_i32, %c0_i32_0 : i32, i32
  }
  func.func @transform_6(%arg0: i32) -> (i32, i32) {
    %c0_i32 = arith.constant 0 : i32
    %c0_i32_0 = arith.constant 0 : i32
    %c0_i32_1 = arith.constant 0 : i32
    return %c0_i32, %c0_i32_0 : i32, i32
  }
  func.func @transform_7(%arg0: i32) -> (i32, i32) {
    %c0_i32 = arith.constant 0 : i32
    %c0_i32_0 = arith.constant 0 : i32
    %c0_i32_1 = arith.constant 0 : i32
    return %c0_i32, %c0_i32_0 : i32, i32
  }
  func.func @transform_8(%arg0: i32) -> (i32, i32) {
    %c0_i32 = arith.constant 0 : i32
    %c0_i32_0 = arith.constant 0 : i32
    %c0_i32_1 = arith.constant 0 : i32
    return %c0_i32, %c0_i32_0 : i32, i32
  }
  func.func @transform_9(%arg0: i32) -> (i32, i32) {
    %c0_i32 = arith.constant 0 : i32
    %c0_i32_0 = arith.constant 0 : i32
    %c0_i32_1 = arith.constant 0 : i32
    return %c0_i32, %c0_i32_0 : i32, i32
  }
  func.func @transform_10(%arg0: i32) -> (i32, i32) {
    %c0_i32 = arith.constant 0 : i32
    %c0_i32_0 = arith.constant 0 : i32
    %c0_i32_1 = arith.constant 0 : i32
    return %c0_i32, %c0_i32_0 : i32, i32
  }
  func.func @transform_11(%arg0: i32) -> (i32, i32) {
    %c0_i32 = arith.constant 0 : i32
    %c0_i32_0 = arith.constant 0 : i32
    %c0_i32_1 = arith.constant 0 : i32
    return %c0_i32, %c0_i32_0 : i32, i32
  }
  func.func @transform_12(%arg0: i32) -> (i32, i32) {
    %c0_i32 = arith.constant 0 : i32
    %c0_i32_0 = arith.constant 0 : i32
    %c0_i32_1 = arith.constant 0 : i32
    return %c0_i32, %c0_i32_0 : i32, i32
  }
  func.func @transform_13(%arg0: i32) -> (i32, i32) {
    %c0_i32 = arith.constant 0 : i32
    %c0_i32_0 = arith.constant 0 : i32
    return %arg0, %c0_i32 : i32, i32
  }
}

</mosaic_0001>

<llo_original>
// kernel: tpu_custom_call.1
$region0: #{tpu_custom_call.1}
  #allocation0 [shape = 'u32[]', space=smem, size = 0x4, offset = 0x4, fixed_abs, tag = 'smem constant byte address 0x4 - core index']
  #allocation1 [shape = 'u32[144,128]{1,0:T(1,128)}', space=vmem, size = 0x12000, scoped, tag = 'internal scratch']
  %s0 = inlined_call_operand.vmem [shape: f32[16,32], index: 0, kind: input, shape index: {}]
  %s1 = inlined_call_operand.vmem [shape: bf16[32,256], index: 1, kind: input, shape index: {}]
  %s2 = inlined_call_operand.vmem [shape: f32[1,256], index: 2, kind: input, shape index: {}]
  %s3 = inlined_call_operand.vmem [shape: f32[1,256], index: 3, kind: input, shape index: {}]
  %s4 = inlined_call_operand.vmem [shape: f32[1,256], index: 4, kind: input, shape index: {}]
  %s5 = inlined_call_operand.hbm [shape: bf16[256,128], index: 5, kind: input, shape index: {}]
  %s6 = inlined_call_operand.vmem [shape: f32[1,128], index: 6, kind: input, shape index: {}]
  %s7 = inlined_call_operand.vmem [shape: f32[1,128], index: 7, kind: input, shape index: {}]
  %s8 = inlined_call_operand.vmem [shape: f32[1,128], index: 8, kind: input, shape index: {}]
  %s9 = inlined_call_operand.vmem [shape: bf16[128,64], index: 9, kind: input, shape index: {}]
  %s10 = inlined_call_operand.vmem [shape: f32[1,64], index: 10, kind: input, shape index: {}]
  %s11 = inlined_call_operand.vmem [shape: f32[1,64], index: 11, kind: input, shape index: {}]
  %s12 = inlined_call_operand.vmem [shape: f32[1,64], index: 12, kind: input, shape index: {}]
  %s13 = inlined_call_operand.hbm [shape: bf16[16,64], index: 13, kind: output, shape index: {}]
  %s14 = sld [smem:[#allocation0]]
  $region66: #{tpu_custom_call.1} parent=0
    _
  %s16 = ssub.s32 1, %s14
  %s17 = scalar_select 0, %s16, %s14
  $region1: #{tpu_custom_call.1} parent=0
    #allocation2 [shape = 'u8[65536]{0}', space=vmem, size = 0x10000, scoped, tag = 'input window, operand 5, single buffered']
    #allocation3 [shape = 's32[1]{0}', space=sflag, size = 0x4, scoped, tag = 'scoped memory for tpu_custom_call.1']
    #allocation4 [shape = 's32[1]{0}', space=sflag, size = 0x4, scoped, tag = 'scoped memory for tpu_custom_call.1']
    #allocation5 [shape = 'u8[4096]{0}', space=vmem, size = 0x1000, scoped, tag = 'output window, operand 0, single buffered']
    %18 = vsyncpa [#allocation3], 0
    %19 = vsyncpa [#allocation4], 0
    // Predicated region
    $region2: #{tpu_custom_call.1} parent=1 // pred_check
      _
    $region3: #{tpu_custom_call.1} parent=1 // pred_check_branch
      %21 = sbr.rel (0) target = $region5
    $region4: #{tpu_custom_call.1} parent=1 // pred_region
      _
    $region5: #{tpu_custom_call.1} parent=1 // pred_fallthru
      _
    // Predicated region
    $region6: #{tpu_custom_call.1} parent=1 // pred_check
      _
    $region7: #{tpu_custom_call.1} parent=1 // pred_check_branch
      %23 = sbr.rel (0) target = $region9
    $region8: #{tpu_custom_call.1} parent=1 // pred_region
      _
    $region9: #{tpu_custom_call.1} parent=1 // pred_fallthru
      _
    // Predicated region
    $region10: #{tpu_custom_call.1} parent=1 // pred_check
      _
    $region11: #{tpu_custom_call.1} parent=1 // pred_check_branch
      %25 = sbr.rel (0) target = $region13
    $region12: #{tpu_custom_call.1} parent=1 // pred_region
      _
    $region13: #{tpu_custom_call.1} parent=1 // pred_fallthru
      _
    // Predicated region
    $region14: #{tpu_custom_call.1} parent=1 // pred_check
      _
    $region15: #{tpu_custom_call.1} parent=1 // pred_check_branch
      %27 = sbr.rel (0) target = $region17
    $region16: #{tpu_custom_call.1} parent=1 // pred_region
      _
    $region17: #{tpu_custom_call.1} parent=1 // pred_fallthru
      _
    // Predicated region
    $region18: #{tpu_custom_call.1} parent=1 // pred_check
      _
    $region19: #{tpu_custom_call.1} parent=1 // pred_check_branch
      %29 = sbr.rel (0) target = $region21
    $region20: #{tpu_custom_call.1} parent=1 // pred_region
      _
    $region21: #{tpu_custom_call.1} parent=1 // pred_fallthru
      _
    // Predicated region
    $region22: #{tpu_custom_call.1} parent=1 // pred_check
      _
    $region23: #{tpu_custom_call.1} parent=1 // pred_check_branch
      %31 = sbr.rel (0) target = $region25
    $region24: #{tpu_custom_call.1} parent=1 // pred_region
      %s33 = ssub.s32 2048, 2048
      %34 = vsyncadd [#allocation3], %s33
      %s35 = sshll.u32 [#allocation2], 4
      %s36 = int_to_ptr.vmem [resolvable:$true] %s35
      %41 = dma.hbm_to_vmem [thread:$0]  %s5, 2048, %s36, [#allocation3], 64, 64, 4
    $region25: #{tpu_custom_call.1} parent=1 // pred_fallthru
      _
    // Predicated region
    $region26: #{tpu_custom_call.1} parent=1 // pred_check
      _
    $region27: #{tpu_custom_call.1} parent=1 // pred_check_branch
      %43 = sbr.rel (0) target = $region29
    $region28: #{tpu_custom_call.1} parent=1 // pred_region
      _
    $region29: #{tpu_custom_call.1} parent=1 // pred_fallthru
      _
    // Predicated region
    $region30: #{tpu_custom_call.1} parent=1 // pred_check
      _
    $region31: #{tpu_custom_call.1} parent=1 // pred_check_branch
      %45 = sbr.rel (0) target = $region33
    $region32: #{tpu_custom_call.1} parent=1 // pred_region
      _
    $region33: #{tpu_custom_call.1} parent=1 // pred_fallthru
      _
    // Predicated region
    $region34: #{tpu_custom_call.1} parent=1 // pred_check
      _
    $region35: #{tpu_custom_call.1} parent=1 // pred_check_branch
      %47 = sbr.rel (0) target = $region37
    $region36: #{tpu_custom_call.1} parent=1 // pred_region
      _
    $region37: #{tpu_custom_call.1} parent=1 // pred_fallthru
      _
    // Predicated region
    $region38: #{tpu_custom_call.1} parent=1 // pred_check
      _
    $region39: #{tpu_custom_call.1} parent=1 // pred_check_branch
      %49 = sbr.rel (0) target = $region41
    $region40: #{tpu_custom_call.1} parent=1 // pred_region
      _
    $region41: #{tpu_custom_call.1} parent=1 // pred_fallthru
      _
    // Predicated region
    $region42: #{tpu_custom_call.1} parent=1 // pred_check
      _
    $region43: #{tpu_custom_call.1} parent=1 // pred_check_branch
      %51 = sbr.rel (0) target = $region45
    $region44: #{tpu_custom_call.1} parent=1 // pred_region
      _
    $region45: #{tpu_custom_call.1} parent=1 // pred_fallthru
      _
    // Predicated region
    $region46: #{tpu_custom_call.1} parent=1 // pred_check
      _
    $region47: #{tpu_custom_call.1} parent=1 // pred_check_branch
      %53 = sbr.rel (0) target = $region49
    $region48: #{tpu_custom_call.1} parent=1 // pred_region
      _
    $region49: #{tpu_custom_call.1} parent=1 // pred_fallthru
      _
    // Predicated region
    $region50: #{tpu_custom_call.1} parent=1 // pred_check
      _
    $region51: #{tpu_custom_call.1} parent=1 // pred_check_branch
      %55 = sbr.rel (0) target = $region53
    $region52: #{tpu_custom_call.1} parent=1 // pred_region
      _
    $region53: #{tpu_custom_call.1} parent=1 // pred_fallthru
      _
    // Predicated region
    $region54: #{tpu_custom_call.1} parent=1 // pred_check
      _
    $region55: #{tpu_custom_call.1} parent=1 // pred_check_branch
      %57 = sbr.rel (0) target = $region57
    $region56: #{tpu_custom_call.1} parent=1 // pred_region
      %58 = dma.done [#allocation3], 2048
    $region57: #{tpu_custom_call.1} parent=1 // pred_fallthru
      _
    %v60 = vld [vmem:[%s0] sm:$0xff]
    %v61 = vld [vmem:[%s0 + $0x8] sm:$0xff]
    %v62 = vpack.c.bf16 %v61, %v60
    %v63 = vld [vmem:[%s1] sm:$0xff]
    %v64 = vld [vmem:[%s1 + $0x8] sm:$0xff]
    %v65 = vld [vmem:[%s1 + $0x10] sm:$0xff]
    %v66 = vld [vmem:[%s1 + $0x18] sm:$0xff]
    %v67 = vld [vmem:[%s2] sm:$0x3]
    %v69 = vlaneseq
    %v70 = vshrl.u32 %v69, 7
    %v71 = vsub.s32 0, %v70
    %v72 = vrot.slane %v67, %v71
    %v73 = vlaneseq
    %v74 = vshrl.u32 %v73, 7
    %v75 = vsub.s32 1, %v74
    %v76 = vrot.slane %v67, %v75
    %v83 = vunpack.c.l.b16 %v63
    %v84 = vunpack.c.h.b16 %v63
    %v85 = vunpack.c.l.b16 %v64
    %v86 = vunpack.c.h.b16 %v64
    %v87 = vunpack.c.l.b16 %v65
    %v88 = vunpack.c.h.b16 %v65
    %v89 = vunpack.c.l.b16 %v66
    %v90 = vunpack.c.h.b16 %v66
    %v91 = vpack.c.b16 %v85, %v83
    %v92 = vpack.c.b16 %v86, %v84
    %v93 = vpack.c.b16 %v89, %v87
    %v94 = vpack.c.b16 %v90, %v88
    %vm99 = vcmask 261120
    %v101 = vsel %vm99, %v62, 0
    %103 = vmatprep.subr.bf16.mxu0 %v92
    %104 = vmatpush1.bf16.msra.mxu0 %v91
    %105 = vmatprep.subr.bf16.mxu0 %v94
    %106 = vmatpush1.bf16.msra.mxu0 %v93
    %107 = vmatprep.subr.bf16.mxu0 0
    %108 = vmatpush1.bf16.msra.mxu0 0
    %109 = vmatprep.subr.bf16.mxu0 0
    %110 = vmatpush1.bf16.msra.mxu0 0
    %111 = vmatprep.subr.bf16.mxu0 0
    %112 = vmatpush1.bf16.msra.mxu0 0
    %113 = vmatprep.subr.bf16.mxu0 0
    %114 = vmatpush1.bf16.msra.mxu0 0
    %115 = vmatprep.subr.bf16.mxu0 0
    %116 = vmatpush1.bf16.msra.mxu0 0
    %117 = vmatprep.subr.bf16.mxu0 0
    %118 = vmatpush1.bf16.msra.mxu0 0
    %119 = vmatprep.subr.bf16.mxu0 0
    %120 = vmatpush1.bf16.msra.mxu0 0
    %121 = vmatprep.subr.bf16.mxu0 0
    %122 = vmatpush1.bf16.msra.mxu0 0
    %123 = vmatprep.subr.bf16.mxu0 0
    %124 = vmatpush1.bf16.msra.mxu0 0
    %125 = vmatprep.subr.bf16.mxu0 0
    %126 = vmatpush1.bf16.msra.mxu0 0
    %127 = vmatprep.subr.bf16.mxu0 0
    %128 = vmatpush1.bf16.msra.mxu0 0
    %129 = vmatprep.subr.bf16.mxu0 0
    %130 = vmatpush1.bf16.msra.mxu0 0
    %131 = vmatprep.subr.bf16.mxu0 0
    %132 = vmatpush1.bf16.msra.mxu0 0
    %133 = vmatprep.subr.bf16.mxu0 0
    %134 = vmatpush1.bf16.msra.mxu0 0
    %135 = vmatprep.mubr.bf16.mxu0 0
    %136 = vmatmul.mubr.bf16.gmra.mrb[0].mxu0 %v101
    %v137 = vpop.f32.mrb[0].mxu0
    %v138 = vadd.f32 %v72, %v137
    %v139 = vpop.f32.mrb[0].mxu0
    %v140 = vadd.f32 %v76, %v139
    %v141 = vpop.f32.mrb[0].mxu0
    %v142 = vadd.f32 %v72, %v141
    %v143 = vpop.f32.mrb[0].mxu0
    %v144 = vadd.f32 %v76, %v143
    %145 = vdwg.mxu0
    %v146 = vld [vmem:[%s3] sm:$0x3]
    %v147 = vld [vmem:[%s4] sm:$0x3]
    %v148 = vadd.f32 %v138, %v140
    %149 = vadd.xlane.f32.xlu0 %v148
    %v150 = vpop.xlane.xlu0 %149
    %v151 = vadd.f32 %v142, %v144
    %152 = vadd.xlane.f32.xlu0 %v151
    %v153 = vpop.xlane.xlu0 %152
    %v154 = vmul.f32 %v150, 0.0052083335
    %v155 = vmul.f32 %v153, 0.0052083335
    %v156 = vsub.f32 %v138, %v154
    %v157 = vsub.f32 %v140, %v154
    %v158 = vsub.f32 %v142, %v155
    %v159 = vsub.f32 %v144, %v155
    %v160 = vmul.f32 %v156, %v156
    %v161 = vmul.f32 %v157, %v157
    %v162 = vmul.f32 %v158, %v158
    %v163 = vmul.f32 %v159, %v159
    %v164 = vadd.f32 %v160, %v161
    %165 = vadd.xlane.f32.xlu0 %v164
    %v166 = vpop.xlane.xlu0 %165
    %v167 = vadd.f32 %v162, %v163
    %168 = vadd.xlane.f32.xlu0 %v167
    %v169 = vpop.xlane.xlu0 %168
    %v170 = vmul.f32 %v154, %v154
    %v171 = vmul.f32 %v155, %v155
    %v172 = vmul.f32 %v170, 64.0
    %v173 = vmul.f32 %v171, 64.0
    %v174 = vsub.f32 %v166, %v172
    %v175 = vsub.f32 %v169, %v173
    %v176 = vmul.f32 %v174, 0.0052083335
    %v177 = vmul.f32 %v175, 0.0052083335
    %v178 = vadd.f32 %v176, 1e-05
    %v179 = vadd.f32 %v177, 1e-05
    %v180 = vrsqrt.pop %v178
    %v181 = vrsqrt.pop %v179
    %v182 = vmul.f32 %v156, %v180
    %v183 = vmul.f32 %v157, %v180
    %v184 = vmul.f32 %v158, %v181
    %v185 = vmul.f32 %v159, %v181
    %v187 = vlaneseq
    %v188 = vshrl.u32 %v187, 7
    %v189 = vsub.s32 0, %v188
    %v190 = vrot.slane %v146, %v189
    %v191 = vlaneseq
    %v192 = vshrl.u32 %v191, 7
    %v193 = vsub.s32 1, %v192
    %v194 = vrot.slane %v146, %v193
    %v197 = vmul.f32 %v182, %v190
    %v198 = vmul.f32 %v183, %v194
    %v199 = vmul.f32 %v184, %v190
    %v200 = vmul.f32 %v185, %v194
    %v202 = vlaneseq
    %v203 = vshrl.u32 %v202, 7
    %v204 = vsub.s32 0, %v203
    %v205 = vrot.slane %v147, %v204
    %v206 = vlaneseq
    %v207 = vshrl.u32 %v206, 7
    %v208 = vsub.s32 1, %v207
    %v209 = vrot.slane %v147, %v208
    %v212 = vadd.f32 %v197, %v205
    %v213 = vadd.f32 %v198, %v209
    %v214 = vadd.f32 %v199, %v205
    %v215 = vadd.f32 %v200, %v209
    %v216 = vmul.f32 %v212, 0.5
    %v217 = vmul.f32 %v213, 0.5
    %v218 = vmul.f32 %v214, 0.5
    %v219 = vmul.f32 %v215, 0.5
    %v220 = vmul.f32 %v212, 0.70710677
    %v221 = vmul.f32 %v213, 0.70710677
    %v222 = vmul.f32 %v214, 0.70710677
    %v223 = vmul.f32 %v215, 0.70710677
    %v224 = vand.u32 2147483647, %v220
    %v225 = vand.u32 2147483647, %v221
    %v226 = vand.u32 2147483647, %v222
    %v227 = vand.u32 2147483647, %v223
    %v228 = vmul.f32 %v224, 0.3275911
    %v229 = vmul.f32 %v225, 0.3275911
    %v230 = vmul.f32 %v226, 0.3275911
    %v231 = vmul.f32 %v227, 0.3275911
    %v232 = vadd.f32 %v228, 1.0
    %v233 = vadd.f32 %v229, 1.0
    %v234 = vadd.f32 %v230, 1.0
    %v235 = vadd.f32 %v231, 1.0
    %v236 = vrcp.pop %v232
    %v237 = vmul.f32 1.0, %v236
    %v238 = vrcp.pop %v233
    %v239 = vmul.f32 1.0, %v238
    %v240 = vrcp.pop %v234
    %v241 = vmul.f32 1.0, %v240
    %v242 = vrcp.pop %v235
    %v243 = vmul.f32 1.0, %v242
    %v244 = vmul.f32 %v237, 1.0614054
    %v245 = vmul.f32 %v239, 1.0614054
    %v246 = vmul.f32 %v241, 1.0614054
    %v247 = vmul.f32 %v243, 1.0614054
    %v248 = vadd.f32 %v244, -1.4531521
    %v249 = vadd.f32 %v245, -1.4531521
    %v250 = vadd.f32 %v246, -1.4531521
    %v251 = vadd.f32 %v247, -1.4531521
    %v252 = vmul.f32 %v248, %v237
    %v253 = vmul.f32 %v249, %v239
    %v254 = vmul.f32 %v250, %v241
    %v255 = vmul.f32 %v251, %v243
    %v256 = vadd.f32 %v252, 1.4214138
    %v257 = vadd.f32 %v253, 1.4214138
    %v258 = vadd.f32 %v254, 1.4214138
    %v259 = vadd.f32 %v255, 1.4214138
    %v260 = vmul.f32 %v256, %v237
    %v261 = vmul.f32 %v257, %v239
    %v262 = vmul.f32 %v258, %v241
    %v263 = vmul.f32 %v259, %v243
    %v264 = vadd.f32 %v260, -0.28449672
    %v265 = vadd.f32 %v261, -0.28449672
    %v266 = vadd.f32 %v262, -0.28449672
    %v267 = vadd.f32 %v263, -0.28449672
    %v268 = vmul.f32 %v264, %v237
    %v269 = vmul.f32 %v265, %v239
    %v270 = vmul.f32 %v266, %v241
    %v271 = vmul.f32 %v267, %v243
    %v272 = vadd.f32 %v268, 0.2548296
    %v273 = vadd.f32 %v269, 0.2548296
    %v274 = vadd.f32 %v270, 0.2548296
    %v275 = vadd.f32 %v271, 0.2548296
    %v276 = vmul.f32 %v272, %v237
    %v277 = vmul.f32 %v273, %v239
    %v278 = vmul.f32 %v274, %v241
    %v279 = vmul.f32 %v275, %v243
    %v280 = vsub.f32 0.0, %v224
    %v281 = vsub.f32 0.0, %v225
    %v282 = vsub.f32 0.0, %v226
    %v283 = vsub.f32 0.0, %v227
    %v284 = vmul.f32 %v280, %v224
    %v285 = vmul.f32 %v281, %v225
    %v286 = vmul.f32 %v282, %v226
    %v287 = vmul.f32 %v283, %v227
    %v288 = vmul.f32 %v284, 1.442695
    %v289 = vpow.pop %v288
    %v290 = vmul.f32 %v285, 1.442695
    %v291 = vpow.pop %v290
    %v292 = vmul.f32 %v286, 1.442695
    %v293 = vpow.pop %v292
    %v294 = vmul.f32 %v287, 1.442695
    %v295 = vpow.pop %v294
    %v296 = vmul.f32 %v276, %v289
    %v297 = vmul.f32 %v277, %v291
    %v298 = vmul.f32 %v278, %v293
    %v299 = vmul.f32 %v279, %v295
    %v300 = vsub.f32 1.0, %v296
    %v301 = vsub.f32 1.0, %v297
    %v302 = vsub.f32 1.0, %v298
    %v303 = vsub.f32 1.0, %v299
    %vm304 = vcmp.lt.f32.partialorder %v220, 0.0
    %vm305 = vcmp.lt.f32.partialorder %v221, 0.0
    %vm306 = vcmp.lt.f32.partialorder %v222, 0.0
    %vm307 = vcmp.lt.f32.partialorder %v223, 0.0
    %v308 = vsub.f32 0.0, %v300
    %v309 = vsub.f32 0.0, %v301
    %v310 = vsub.f32 0.0, %v302
    %v311 = vsub.f32 0.0, %v303
    %v312 = vsel %vm304, %v308, %v300
    %v313 = vsel %vm305, %v309, %v301
    %v314 = vsel %vm306, %v310, %v302
    %v315 = vsel %vm307, %v311, %v303
    %v316 = vadd.f32 %v312, 1.0
    %v317 = vadd.f32 %v313, 1.0
    %v318 = vadd.f32 %v314, 1.0
    %v319 = vadd.f32 %v315, 1.0
    %v320 = vmul.f32 %v216, %v316
    %v321 = vmul.f32 %v217, %v317
    %v322 = vmul.f32 %v218, %v318
    %v323 = vmul.f32 %v219, %v319
    %v324 = vpack.c.bf16 %v322, %v320
    %v325 = vpack.c.bf16 %v323, %v321
    %v326 = vld [vmem:[#allocation2] sm:$0xf]
    %v327 = vld [vmem:[#allocation2 + $0x4] sm:$0xf]
    %v328 = vld [vmem:[#allocation2 + $0x8] sm:$0xf]
    %v329 = vld [vmem:[#allocation2 + $0xc] sm:$0xf]
    %v330 = vld [vmem:[#allocation2 + $0x10] sm:$0xf]
    %v331 = vld [vmem:[#allocation2 + $0x14] sm:$0xf]
    %v332 = vld [vmem:[#allocation2 + $0x18] sm:$0xf]
    %v333 = vld [vmem:[#allocation2 + $0x1c] sm:$0xf]
    %v334 = vld [vmem:[#allocation2 + $0x20] sm:$0xf]
    %v335 = vld [vmem:[#allocation2 + $0x24] sm:$0xf]
    %v336 = vld [vmem:[#allocation2 + $0x28] sm:$0xf]
    %v337 = vld [vmem:[#allocation2 + $0x2c] sm:$0xf]
    %v338 = vld [vmem:[#allocation2 + $0x30] sm:$0xf]
    %v339 = vld [vmem:[#allocation2 + $0x34] sm:$0xf]
    %v340 = vld [vmem:[#allocation2 + $0x38] sm:$0xf]
    %v341 = vld [vmem:[#allocation2 + $0x3c] sm:$0xf]
    %v342 = vld [vmem:[#allocation2 + $0x40] sm:$0xf]
    %v343 = vld [vmem:[#allocation2 + $0x44] sm:$0xf]
    %v344 = vld [vmem:[#allocation2 + $0x48] sm:$0xf]
    %v345 = vld [vmem:[#allocation2 + $0x4c] sm:$0xf]
    %v346 = vld [vmem:[#allocation2 + $0x50] sm:$0xf]
    %v347 = vld [vmem:[#allocation2 + $0x54] sm:$0xf]
    %v348 = vld [vmem:[#allocation2 + $0x58] sm:$0xf]
    %v349 = vld [vmem:[#allocation2 + $0x5c] sm:$0xf]
    %v350 = vld [vmem:[#allocation2 + $0x60] sm:$0xf]
    %v351 = vld [vmem:[#allocation2 + $0x64] sm:$0xf]
    %v352 = vld [vmem:[#allocation2 + $0x68] sm:$0xf]
    %v353 = vld [vmem:[#allocation2 + $0x6c] sm:$0xf]
    %v354 = vld [vmem:[#allocation2 + $0x70] sm:$0xf]
    %v355 = vld [vmem:[#allocation2 + $0x74] sm:$0xf]
    %v356 = vld [vmem:[#allocation2 + $0x78] sm:$0xf]
    %v357 = vld [vmem:[#allocation2 + $0x7c] sm:$0xf]
    %v358 = vld [vmem:[%s6] sm:$0x1]
    %v360 = vlaneseq
    %v361 = vshrl.u32 %v360, 7
    %v362 = vsub.s32 0, %v361
    %v363 = vrot.slane %v358, %v362
    %v397 = vunpack.c.l.b16 %v326
    %v398 = vunpack.c.l.b16 %v327
    %v399 = vunpack.c.l.b16 %v328
    %v400 = vunpack.c.l.b16 %v329
    %v401 = vunpack.c.l.b16 %v330
    %v402 = vunpack.c.l.b16 %v331
    %v403 = vunpack.c.l.b16 %v332
    %v404 = vunpack.c.l.b16 %v333
    %v405 = vunpack.c.l.b16 %v334
    %v406 = vunpack.c.l.b16 %v335
    %v407 = vunpack.c.l.b16 %v336
    %v408 = vunpack.c.l.b16 %v337
    %v409 = vunpack.c.l.b16 %v338
    %v410 = vunpack.c.l.b16 %v339
    %v411 = vunpack.c.l.b16 %v340
    %v412 = vunpack.c.l.b16 %v341
    %v413 = vunpack.c.l.b16 %v342
    %v414 = vunpack.c.l.b16 %v343
    %v415 = vunpack.c.l.b16 %v344
    %v416 = vunpack.c.l.b16 %v345
    %v417 = vunpack.c.l.b16 %v346
    %v418 = vunpack.c.l.b16 %v347
    %v419 = vunpack.c.l.b16 %v348
    %v420 = vunpack.c.l.b16 %v349
    %v421 = vunpack.c.l.b16 %v350
    %v422 = vunpack.c.l.b16 %v351
    %v423 = vunpack.c.l.b16 %v352
    %v424 = vunpack.c.l.b16 %v353
    %v425 = vunpack.c.l.b16 %v354
    %v426 = vunpack.c.l.b16 %v355
    %v427 = vunpack.c.l.b16 %v356
    %v428 = vunpack.c.l.b16 %v357
    %v429 = vpack.c.b16 %v398, %v397
    %v430 = vpack.c.b16 %v400, %v399
    %v431 = vpack.c.b16 %v402, %v401
    %v432 = vpack.c.b16 %v404, %v403
    %v433 = vpack.c.b16 %v406, %v405
    %v434 = vpack.c.b16 %v408, %v407
    %v435 = vpack.c.b16 %v410, %v409
    %v436 = vpack.c.b16 %v412, %v411
    %v437 = vpack.c.b16 %v414, %v413
    %v438 = vpack.c.b16 %v416, %v415
    %v439 = vpack.c.b16 %v418, %v417
    %v440 = vpack.c.b16 %v420, %v419
    %v441 = vpack.c.b16 %v422, %v421
    %v442 = vpack.c.b16 %v424, %v423
    %v443 = vpack.c.b16 %v426, %v425
    %v444 = vpack.c.b16 %v428, %v427
    %461 = vmatprep.subr.bf16.mxu0 0
    %462 = vmatpush1.bf16.msra.mxu0 %v429
    %463 = vmatprep.subr.bf16.mxu0 0
    %464 = vmatpush1.bf16.msra.mxu0 %v430
    %465 = vmatprep.subr.bf16.mxu0 0
    %466 = vmatpush1.bf16.msra.mxu0 %v431
    %467 = vmatprep.subr.bf16.mxu0 0
    %468 = vmatpush1.bf16.msra.mxu0 %v432
    %469 = vmatprep.subr.bf16.mxu0 0
    %470 = vmatpush1.bf16.msra.mxu0 %v433
    %471 = vmatprep.subr.bf16.mxu0 0
    %472 = vmatpush1.bf16.msra.mxu0 %v434
    %473 = vmatprep.subr.bf16.mxu0 0
    %474 = vmatpush1.bf16.msra.mxu0 %v435
    %475 = vmatprep.subr.bf16.mxu0 0
    %476 = vmatpush1.bf16.msra.mxu0 %v436
    %477 = vmatprep.subr.bf16.mxu0 0
    %478 = vmatpush1.bf16.msra.mxu0 %v437
    %479 = vmatprep.subr.bf16.mxu0 0
    %480 = vmatpush1.bf16.msra.mxu0 %v438
    %481 = vmatprep.subr.bf16.mxu0 0
    %482 = vmatpush1.bf16.msra.mxu0 %v439
    %483 = vmatprep.subr.bf16.mxu0 0
    %484 = vmatpush1.bf16.msra.mxu0 %v440
    %485 = vmatprep.subr.bf16.mxu0 0
    %486 = vmatpush1.bf16.msra.mxu0 %v441
    %487 = vmatprep.subr.bf16.mxu0 0
    %488 = vmatpush1.bf16.msra.mxu0 %v442
    %489 = vmatprep.subr.bf16.mxu0 0
    %490 = vmatpush1.bf16.msra.mxu0 %v443
    %491 = vmatprep.subr.bf16.mxu0 0
    %492 = vmatpush1.bf16.msra.mxu0 %v444
    %493 = vmatprep.mubr.bf16.mxu0 %v325
    %494 = vmatmul.mubr.bf16.gmra.mrb[0].mxu0 %v324
    %v495 = vpop.f32.mrb[0].mxu0
    %v496 = vadd.f32 %v363, %v495
    %v497 = vpop.f32.mrb[0].mxu0
    %v498 = vpop.f32.mrb[0].mxu0
    %v499 = vadd.f32 %v363, %v498
    %v500 = vpop.f32.mrb[0].mxu0
    %501 = vdwg.mxu0
    %v502 = vld [vmem:[%s7] sm:$0x1]
    %v503 = vld [vmem:[%s8] sm:$0x1]
    %504 = vadd.xlane.f32.xlu0 %v496
    %v505 = vpop.xlane.xlu0 %504
    %506 = vadd.xlane.f32.xlu0 %v499
    %v507 = vpop.xlane.xlu0 %506
    %v508 = vmul.f32 %v505, 0.010416667
    %v509 = vmul.f32 %v507, 0.010416667
    %v510 = vsub.f32 %v496, %v508
    %v511 = vsub.f32 %v499, %v509
    %v512 = vmul.f32 %v510, %v510
    %v513 = vmul.f32 %v511, %v511
    %514 = vadd.xlane.f32.xlu0 %v512
    %v515 = vpop.xlane.xlu0 %514
    %516 = vadd.xlane.f32.xlu0 %v513
    %v517 = vpop.xlane.xlu0 %516
    %v518 = vmul.f32 %v508, %v508
    %v519 = vmul.f32 %v509, %v509
    %v520 = vmul.f32 %v518, 32.0
    %v521 = vmul.f32 %v519, 32.0
    %v522 = vsub.f32 %v515, %v520
    %v523 = vsub.f32 %v517, %v521
    %v524 = vmul.f32 %v522, 0.010416667
    %v525 = vmul.f32 %v523, 0.010416667
    %v526 = vadd.f32 %v524, 1e-05
    %v527 = vadd.f32 %v525, 1e-05
    %v528 = vrsqrt.pop %v526
    %v529 = vrsqrt.pop %v527
    %v530 = vmul.f32 %v510, %v528
    %v531 = vmul.f32 %v511, %v529
    %v533 = vlaneseq
    %v534 = vshrl.u32 %v533, 7
    %v535 = vsub.s32 0, %v534
    %v536 = vrot.slane %v502, %v535
    %v538 = vmul.f32 %v530, %v536
    %v539 = vmul.f32 %v531, %v536
    %v541 = vlaneseq
    %v542 = vshrl.u32 %v541, 7
    %v543 = vsub.s32 0, %v542
    %v544 = vrot.slane %v503, %v543
    %v546 = vadd.f32 %v538, %v544
    %v547 = vadd.f32 %v539, %v544
    %v548 = vmul.f32 %v546, 0.5
    %v549 = vmul.f32 %v547, 0.5
    %v550 = vmul.f32 %v546, 0.70710677
    %v551 = vmul.f32 %v547, 0.70710677
    %v552 = vand.u32 2147483647, %v550
    %v553 = vand.u32 2147483647, %v551
    %v554 = vmul.f32 %v552, 0.3275911
    %v555 = vmul.f32 %v553, 0.3275911
    %v556 = vadd.f32 %v554, 1.0
    %v557 = vadd.f32 %v555, 1.0
    %v558 = vrcp.pop %v556
    %v559 = vmul.f32 1.0, %v558
    %v560 = vrcp.pop %v557
    %v561 = vmul.f32 1.0, %v560
    %v562 = vmul.f32 %v559, 1.0614054
    %v563 = vmul.f32 %v561, 1.0614054
    %v564 = vadd.f32 %v562, -1.4531521
    %v565 = vadd.f32 %v563, -1.4531521
    %v566 = vmul.f32 %v564, %v559
    %v567 = vmul.f32 %v565, %v561
    %v568 = vadd.f32 %v566, 1.4214138
    %v569 = vadd.f32 %v567, 1.4214138
    %v570 = vmul.f32 %v568, %v559
    %v571 = vmul.f32 %v569, %v561
    %v572 = vadd.f32 %v570, -0.28449672
    %v573 = vadd.f32 %v571, -0.28449672
    %v574 = vmul.f32 %v572, %v559
    %v575 = vmul.f32 %v573, %v561
    %v576 = vadd.f32 %v574, 0.2548296
    %v577 = vadd.f32 %v575, 0.2548296
    %v578 = vmul.f32 %v576, %v559
    %v579 = vmul.f32 %v577, %v561
    %v580 = vsub.f32 0.0, %v552
    %v581 = vsub.f32 0.0, %v553
    %v582 = vmul.f32 %v580, %v552
    %v583 = vmul.f32 %v581, %v553
    %v584 = vmul.f32 %v582, 1.442695
    %v585 = vpow.pop %v584
    %v586 = vmul.f32 %v583, 1.442695
    %v587 = vpow.pop %v586
    %v588 = vmul.f32 %v578, %v585
    %v589 = vmul.f32 %v579, %v587
    %v590 = vsub.f32 1.0, %v588
    %v591 = vsub.f32 1.0, %v589
    %vm592 = vcmp.lt.f32.partialorder %v550, 0.0
    %vm593 = vcmp.lt.f32.partialorder %v551, 0.0
    %v594 = vsub.f32 0.0, %v590
    %v595 = vsub.f32 0.0, %v591
    %v596 = vsel %vm592, %v594, %v590
    %v597 = vsel %vm593, %v595, %v591
    %v598 = vadd.f32 %v596, 1.0
    %v599 = vadd.f32 %v597, 1.0
    %v600 = vmul.f32 %v548, %v598
    %v601 = vmul.f32 %v549, %v599
    %v602 = vpack.c.bf16 %v601, %v600
    %v603 = vld [vmem:[%s9] sm:$0xf]
    %v604 = vld [vmem:[%s9 + $0x4] sm:$0xf]
    %v605 = vld [vmem:[%s9 + $0x8] sm:$0xf]
    %v606 = vld [vmem:[%s9 + $0xc] sm:$0xf]
    %v607 = vld [vmem:[%s9 + $0x10] sm:$0xf]
    %v608 = vld [vmem:[%s9 + $0x14] sm:$0xf]
    %v609 = vld [vmem:[%s9 + $0x18] sm:$0xf]
    %v610 = vld [vmem:[%s9 + $0x1c] sm:$0xf]
    %v611 = vld [vmem:[%s9 + $0x20] sm:$0xf]
    %v612 = vld [vmem:[%s9 + $0x24] sm:$0xf]
    %v613 = vld [vmem:[%s9 + $0x28] sm:$0xf]
    %v614 = vld [vmem:[%s9 + $0x2c] sm:$0xf]
    %v615 = vld [vmem:[%s9 + $0x30] sm:$0xf]
    %v616 = vld [vmem:[%s9 + $0x34] sm:$0xf]
    %v617 = vld [vmem:[%s9 + $0x38] sm:$0xf]
    %v618 = vld [vmem:[%s9 + $0x3c] sm:$0xf]
    %v619 = vld [vmem:[%s10] sm:$0x1]
    %v621 = vlaneseq
    %v622 = vshrl.u32 %v621, 7
    %v623 = vsub.s32 0, %v622
    %v624 = vrot.slane %v619, %v623
    %v642 = vunpack.c.l.b16 %v603
    %v643 = vunpack.c.l.b16 %v604
    %v644 = vunpack.c.l.b16 %v605
    %v645 = vunpack.c.l.b16 %v606
    %v646 = vunpack.c.l.b16 %v607
    %v647 = vunpack.c.l.b16 %v608
    %v648 = vunpack.c.l.b16 %v609
    %v649 = vunpack.c.l.b16 %v610
    %v650 = vunpack.c.l.b16 %v611
    %v651 = vunpack.c.l.b16 %v612
    %v652 = vunpack.c.l.b16 %v613
    %v653 = vunpack.c.l.b16 %v614
    %v654 = vunpack.c.l.b16 %v615
    %v655 = vunpack.c.l.b16 %v616
    %v656 = vunpack.c.l.b16 %v617
    %v657 = vunpack.c.l.b16 %v618
    %v658 = vpack.c.b16 %v643, %v642
    %v659 = vpack.c.b16 %v645, %v644
    %v660 = vpack.c.b16 %v647, %v646
    %v661 = vpack.c.b16 %v649, %v648
    %v662 = vpack.c.b16 %v651, %v650
    %v663 = vpack.c.b16 %v653, %v652
    %v664 = vpack.c.b16 %v655, %v654
    %v665 = vpack.c.b16 %v657, %v656
    %674 = vmatprep.subr.bf16.mxu0 0
    %675 = vmatpush1.bf16.msra.mxu0 %v658
    %676 = vmatprep.subr.bf16.mxu0 0
    %677 = vmatpush1.bf16.msra.mxu0 %v659
    %678 = vmatprep.subr.bf16.mxu0 0
    %679 = vmatpush1.bf16.msra.mxu0 %v660
    %680 = vmatprep.subr.bf16.mxu0 0
    %681 = vmatpush1.bf16.msra.mxu0 %v661
    %682 = vmatprep.subr.bf16.mxu0 0
    %683 = vmatpush1.bf16.msra.mxu0 %v662
    %684 = vmatprep.subr.bf16.mxu0 0
    %685 = vmatpush1.bf16.msra.mxu0 %v663
    %686 = vmatprep.subr.bf16.mxu0 0
    %687 = vmatpush1.bf16.msra.mxu0 %v664
    %688 = vmatprep.subr.bf16.mxu0 0
    %689 = vmatpush1.bf16.msra.mxu0 %v665
    %690 = vmatprep.subr.bf16.mxu0 0
    %691 = vmatpush1.bf16.msra.mxu0 0
    %692 = vmatprep.subr.bf16.mxu0 0
    %693 = vmatpush1.bf16.msra.mxu0 0
    %694 = vmatprep.subr.bf16.mxu0 0
    %695 = vmatpush1.bf16.msra.mxu0 0
    %696 = vmatprep.subr.bf16.mxu0 0
    %697 = vmatpush1.bf16.msra.mxu0 0
    %698 = vmatprep.subr.bf16.mxu0 0
    %699 = vmatpush1.bf16.msra.mxu0 0
    %700 = vmatprep.subr.bf16.mxu0 0
    %701 = vmatpush1.bf16.msra.mxu0 0
    %702 = vmatprep.subr.bf16.mxu0 0
    %703 = vmatpush1.bf16.msra.mxu0 0
    %704 = vmatprep.subr.bf16.mxu0 0
    %705 = vmatpush1.bf16.msra.mxu0 0
    %706 = vmatprep.mubr.bf16.mxu0 0
    %707 = vmatmul.mubr.bf16.gmra.mrb[0].mxu0 %v602
    %v708 = vpop.f32.mrb[0].mxu0
    %v709 = vadd.f32 %v624, %v708
    %v710 = vpop.f32.mrb[0].mxu0
    %v711 = vpop.f32.mrb[0].mxu0
    %v712 = vadd.f32 %v624, %v711
    %v713 = vpop.f32.mrb[0].mxu0
    %714 = vdwg.mxu0
    %v715 = vld [vmem:[%s11] sm:$0x1]
    %v716 = vld [vmem:[%s12] sm:$0x1]
    %vm717 = vcmask 523264
    %v718 = vsel %vm717, %v709, 0.0
    %719 = vadd.xlane.f32.xlu0 %v718
    %v720 = vpop.xlane.xlu0 %719
    %v721 = vsel %vm717, %v712, 0.0
    %722 = vadd.xlane.f32.xlu0 %v721
    %v723 = vpop.xlane.xlu0 %722
    %v724 = vmul.f32 %v720, 0.015625
    %v725 = vmul.f32 %v723, 0.015625
    %v726 = vsub.f32 %v709, %v724
    %v727 = vsub.f32 %v712, %v725
    %v728 = vmul.f32 %v726, %v726
    %v729 = vmul.f32 %v727, %v727
    %v730 = vsel %vm717, %v728, 0.0
    %731 = vadd.xlane.f32.xlu0 %v730
    %v732 = vpop.xlane.xlu0 %731
    %v733 = vsel %vm717, %v729, 0.0
    %734 = vadd.xlane.f32.xlu0 %v733
    %v735 = vpop.xlane.xlu0 %734
    %v736 = vmul.f32 %v732, 0.015625
    %v737 = vmul.f32 %v735, 0.015625
    %v738 = vadd.f32 %v736, 1e-05
    %v739 = vadd.f32 %v737, 1e-05
    %v740 = vrsqrt.pop %v738
    %v741 = vrsqrt.pop %v739
    %v742 = vmul.f32 %v726, %v740
    %v743 = vmul.f32 %v727, %v741
    %v745 = vlaneseq
    %v746 = vshrl.u32 %v745, 7
    %v747 = vsub.s32 0, %v746
    %v748 = vrot.slane %v715, %v747
    %v750 = vmul.f32 %v742, %v748
    %v751 = vmul.f32 %v743, %v748
    %v753 = vlaneseq
    %v754 = vshrl.u32 %v753, 7
    %v755 = vsub.s32 0, %v754
    %v756 = vrot.slane %v716, %v755
    %v758 = vadd.f32 %v750, %v756
    %v759 = vadd.f32 %v751, %v756
    %v760 = vpack.c.bf16 %v759, %v758
    %v762 = vunpack.c.l.b16 %v760
    %v763 = vunpack.c.h.b16 %v760
    %v764 = vpack.c.b16 %v762, %v762
    %v765 = vpack.c.b16 %v763, %v763
    %vm768 = vcmask 519168
    %769 = vst.msk [vmem:[#allocation5] sm:$0xf] %vm768, %v764
    %770 = vst.msk [vmem:[#allocation5 + $0x4] sm:$0xf] %vm768, %v765
    // Predicated region
    $region58: #{tpu_custom_call.1} parent=1 // pred_check
      _
    $region59: #{tpu_custom_call.1} parent=1 // pred_check_branch
      %772 = sbr.rel (0) target = $region61
    $region60: #{tpu_custom_call.1} parent=1 // pred_region
      %s774 = ssub.s32 128, 128
      %775 = vsyncadd [#allocation4], %s774
      %s776 = sshll.u32 [#allocation5], 4
      %s777 = int_to_ptr.vmem [resolvable:$true] %s776
      %782 = dma.vmem_to_hbm [thread:$0]  %s777, 128, %s13, [#allocation4], 64, 64, 4
    $region61: #{tpu_custom_call.1} parent=1 // pred_fallthru
      _
    // Predicated region
    $region62: #{tpu_custom_call.1} parent=1 // pred_check
      _
    $region63: #{tpu_custom_call.1} parent=1 // pred_check_branch
      %784 = sbr.rel (0) target = $region65
    $region64: #{tpu_custom_call.1} parent=1 // pred_region
      %785 = dma.done [#allocation4], 128
    $region65: #{tpu_custom_call.1} parent=1 // pred_fallthru
      _
    %786 = vsyncpa [#allocation3], 1
    %787 = vsyncpa [#allocation4], 1

</llo_original>
